<compile_context>
chip_gen: v5e
topology: v5e:2x2
jax: 0.10.0
libtpu: 0.0.40
codegen_flags: <defaults>
</compile_context>

<pallas_src>
import math

import jax
import jax.numpy as jnp
from jax.experimental import pallas as pl
from jax.experimental.pallas import tpu as pltpu


# -----------------------------------------------------------------------------
# Pallas kernel: conv2d (same padding, stride 1, no bias) + LIF update + spike
# -----------------------------------------------------------------------------
def _convlif_kernel(x_ref, w_ref, v_ref, z_ref, leak_ref, thresh_ref,
                    v_out_ref, z_out_ref, acc_ref):
    """One batch-block of the ConvLIF forward.

    Shapes (channel data lives on the fused W*C lane axis):
      x_ref:       (nb, H, W*Cin)       input rows
      w_ref:       (K, W*Cin, W*Chid)   row-Toeplitz conv weights (per kh tap)
      v_ref/z_ref: (nb, H, W*Chid)      previous membrane / spike state
      leak_ref:    (1, W*Chid)          sigmoid(leak), tiled over W  (f32)
      thresh_ref:  (1, W*Chid)          clamp(thresh, 0.01), tiled over W (f32)
      v_out_ref / z_out_ref: (nb, H, W*Chid)
      acc_ref:     (H, W*Chid) f32 VMEM scratch (conv accumulator)
    """
    nb, H, _ = x_ref.shape
    K = w_ref.shape[0]
    pad = K // 2

    leak = leak_ref[...]        # (1, W*Chid)
    thresh = thresh_ref[...]    # (1, W*Chid)

    for n in range(nb):                       # static Python loop; nb is small
        # ---- convolution: one lane-dense matmul per kh tap ------------------
        acc_ref[...] = jnp.zeros_like(acc_ref)
        for kh in range(K):                   # static; K is small (e.g. 3)
            off = kh - pad                    # row offset of this tap
            ri0 = max(0, off)                 # first input row used
            ro0 = max(0, -off)                # first output row written
            rows = H - abs(off)               # 'same' row padding via clipping
            contrib = jnp.dot(x_ref[n, ri0:ri0 + rows, :], w_ref[kh],
                              preferred_element_type=jnp.float32)
            acc_ref[ro0:ro0 + rows, :] += contrib
        ff = acc_ref[...]                     # (H, W*Chid), f32

        # ---- LIF update (hard reset; detach only affects backward) ----------
        v = v_ref[n].astype(jnp.float32)
        z = z_ref[n].astype(jnp.float32)
        v_out = v * leak * (1.0 - z) + (1.0 - leak) * ff
        # arctanspike forward = heaviside(v_out - thresh).
        # TODO(synk): confirm the PyTorch convention at exactly v_out == thresh.
        z_out = (v_out > thresh).astype(jnp.float32)

        v_out_ref[n] = v_out.astype(v_out_ref.dtype)
        z_out_ref[n] = z_out.astype(z_out_ref.dtype)


# -----------------------------------------------------------------------------
# Wrapper helpers
# -----------------------------------------------------------------------------
def _pick_batch_block(n):
    """Largest batch-block size that still yields >= 2 grid steps (v7x 2-TC)."""
    if n >= 2:
        for nb in range(n // 2, 0, -1):
            if n % nb == 0:
                return nb
    return n


def _toeplitz_weights(weight_hwio, W):
    """Fold the kw taps and the 'same' width padding into per-kh matrices.

    Returns w_toe of shape (K, W*Cin, W*Chid) with
      w_toe[kh, wi*Cin+ci, wo*Chid+co] = weight[kh, kw, ci, co]
    for kw = wi - wo + pad in [0, K); entries falling outside [0, W) are zero
    (i.e. the zero padding along W is baked into the weight matrix).
    """
    K, _, Cin, Chid = weight_hwio.shape
    pad = K // 2
    idx = jnp.arange(W)
    kw = jnp.arange(K)
    # S[k, wi, wo] = 1 iff input column wi feeds output column wo through tap k
    S = (idx[None, :, None] == (idx[None, None, :] + kw[:, None, None] - pad))
    S = S.astype(weight_hwio.dtype)
    w_toe = jnp.einsum('kab,hkio->haibo', S, weight_hwio)
    return w_toe.reshape(K, W * Cin, W * Chid)


# -----------------------------------------------------------------------------
# Wrapper: NCHW in/out (PyTorch convention), fused-NHWC inside the kernel.
# -----------------------------------------------------------------------------
def conv_lif_forward(x_nchw, weight_hwio, leak, thresh, prev_state=None,
                     residual=0.0, matmul_dtype=None):
    """Equivalent of ConvLIF.forward(input_, prev_state, residual).

    Returns (spikes_nchw, state) with state of shape (2, N, Chid, H, W).
    `matmul_dtype=jnp.bfloat16` casts only the conv matmul operands (v6e/v7x).
    """
    N, Cin, H, W = x_nchw.shape
    K = weight_hwio.shape[0]
    Chid = weight_hwio.shape[3]
    dtype = x_nchw.dtype
    WCin = W * Cin
    WCh = W * Chid

    # --- boundary glue (kept only for PyTorch NCHW parity) -------------------
    x = jnp.transpose(x_nchw, (0, 2, 3, 1)).reshape(N, H, WCin)

    if prev_state is None:
        v = jnp.zeros((N, H, WCh), dtype)
        z = jnp.zeros((N, H, WCh), dtype)
    else:
        v = jnp.transpose(prev_state[0], (0, 2, 3, 1)).reshape(N, H, WCh)
        z = jnp.transpose(prev_state[1], (0, 2, 3, 1)).reshape(N, H, WCh)

    # Row-Toeplitz conv weights (K lane-dense matmuls instead of K*K tiny ones).
    w_toe = _toeplitz_weights(weight_hwio, W)

    mm_dtype = dtype if matmul_dtype is None else matmul_dtype
    x_mm = x.astype(mm_dtype)
    w_mm = w_toe.astype(mm_dtype)

    # Hoisted parameter math, tiled onto the fused (W*Chid) lane axis.
    leak_lane = jnp.tile(jax.nn.sigmoid(leak.reshape(Chid).astype(jnp.float32)),
                         W).reshape(1, WCh)
    thresh_lane = jnp.tile(jnp.maximum(thresh.reshape(Chid).astype(jnp.float32),
                                       0.01), W).reshape(1, WCh)

    nb = _pick_batch_block(N)
    grid = (N // nb,)

    blk_x = pl.BlockSpec((nb, H, WCin), lambda i: (i, 0, 0))
    blk_s = pl.BlockSpec((nb, H, WCh), lambda i: (i, 0, 0))
    blk_p = pl.BlockSpec((1, WCh), lambda i: (0, 0))

    v_out, z_out = pl.pallas_call(
        _convlif_kernel,
        out_shape=(
            jax.ShapeDtypeStruct((N, H, WCh), dtype),   # v_out
            jax.ShapeDtypeStruct((N, H, WCh), dtype),   # z_out (spikes)
        ),
        grid=grid,
        in_specs=[
            blk_x,
            pl.BlockSpec((K, WCin, WCh), lambda i: (0, 0, 0)),
            blk_s,          # v
            blk_s,          # z
            blk_p,          # leak
            blk_p,          # thresh
        ],
        out_specs=[blk_s, blk_s],
        scratch_shapes=[pltpu.VMEM((H, WCh), jnp.float32)],
        compiler_params=pltpu.CompilerParams(
            dimension_semantics=("parallel",)),
    )(x_mm, w_mm, v, z, leak_lane, thresh_lane)

    # Back to PyTorch NCHW layout.
    to_nchw = lambda a: jnp.transpose(a.reshape(N, H, W, Chid), (0, 3, 1, 2))
    z_nchw = to_nchw(z_out)
    spikes = z_nchw + residual
    state = jnp.stack([to_nchw(v_out), z_nchw])
    return spikes, state


# -----------------------------------------------------------------------------
# Pure-JAX reference (correctness check only).
# -----------------------------------------------------------------------------
def _reference_forward(x_nchw, weight_hwio, leak, thresh, prev_state=None,
                       residual=0.0):
    K = weight_hwio.shape[0]
    Chid = weight_hwio.shape[3]
    pad = K // 2
    w_oihw = jnp.transpose(weight_hwio, (3, 2, 0, 1))
    ff = jax.lax.conv_general_dilated(
        x_nchw, w_oihw, window_strides=(1, 1),
        padding=((pad, pad), (pad, pad)),
        dimension_numbers=("NCHW", "OIHW", "NCHW"))
    if prev_state is None:
        v = jnp.zeros_like(ff)
        z = jnp.zeros_like(ff)
    else:
        v, z = prev_state[0], prev_state[1]
    leak_s = jax.nn.sigmoid(leak.reshape(1, Chid, 1, 1))
    th = jnp.maximum(thresh.reshape(1, Chid, 1, 1), 0.01)
    v_out = v * leak_s * (1.0 - z) + (1.0 - leak_s) * ff
    z_out = (v_out > th).astype(ff.dtype)
    return z_out + residual, jnp.stack([v_out, z_out])


def _check(spikes, state, spikes_ref, state_ref, thresh, tag):
    v, v_ref = state[0], state_ref[0]
    assert jnp.allclose(v, v_ref, atol=1e-5), f"{tag}: membrane mismatch"
    th = jnp.maximum(thresh.reshape(1, -1, 1, 1), 0.01)
    # Only compare spikes away from the decision boundary (float-order noise).
    safe = jnp.abs(v_ref - th) > 1e-4
    assert bool(jnp.all(jnp.where(safe, spikes == spikes_ref, True))), \
        f"{tag}: spike mismatch"
    assert bool(jnp.all(jnp.where(safe, state[1] == state_ref[1], True))), \
        f"{tag}: z state mismatch"


if __name__ == "__main__":
    # Small shapes consistent with the module.
    N, Cin, H, W = 2, 4, 16, 16
    Chid, K = 8, 3

    key = jax.random.PRNGKey(0)
    k_x1, k_x2, k_w, k_leak = jax.random.split(key, 4)

    x1 = jax.random.normal(k_x1, (N, Cin, H, W), jnp.float32)
    x2 = jax.random.normal(k_x2, (N, Cin, H, W), jnp.float32)

    # Deterministic parameter init mirroring ConvLIF.__init__:
    w_scale = math.sqrt(1.0 / Cin)
    weight_hwio = jax.random.uniform(k_w, (K, K, Cin, Chid), jnp.float32,
                                     minval=-w_scale, maxval=w_scale)
    leak = jax.random.normal(k_leak, (Chid,), jnp.float32) * 0.1 + (-4.0)
    thresh = jnp.full((Chid,), 0.8, jnp.float32)       # thresh=(0.8, 0.0)

    # --- step 1: no previous state -------------------------------------------
    spikes1, state1 = conv_lif_forward(x1, weight_hwio, leak, thresh,
                                       prev_state=None, residual=0.0)
    jax.block_until_ready((spikes1, state1))
    spikes1_ref, state1_ref = _reference_forward(x1, weight_hwio, leak, thresh)
    _check(spikes1, state1, spikes1_ref, state1_ref, thresh, "step1")

    # --- step 2: feed the state back (exercises the hard-reset v*leak*(1-z)) -
    residual = 0.25
    spikes2, state2 = conv_lif_forward(x2, weight_hwio, leak, thresh,
                                       prev_state=state1, residual=residual)
    jax.block_until_ready((spikes2, state2))
    spikes2_ref, state2_ref = _reference_forward(x2, weight_hwio, leak, thresh,
                                                 prev_state=state1,
                                                 residual=residual)
    _check(spikes2, state2, spikes2_ref, state2_ref, thresh, "step2")

    print("KERNEL_OK")
</pallas_src>

<mosaic_0001>
module attributes {stable_mosaic.version = 11 : i64} {
  func.func @_convlif_kernel(%arg0: i32, %arg1: memref<1x16x64xf32, #tpu.memory_space<vmem>>, %arg2: memref<3x64x128xf32, #tpu.memory_space<vmem>>, %arg3: memref<1x16x128xf32, #tpu.memory_space<vmem>>, %arg4: memref<1x16x128xf32, #tpu.memory_space<vmem>>, %arg5: memref<1x128xf32, #tpu.memory_space<vmem>>, %arg6: memref<1x128xf32, #tpu.memory_space<vmem>>, %arg7: memref<1x16x128xf32, #tpu.memory_space<vmem>>, %arg8: memref<1x16x128xf32, #tpu.memory_space<vmem>>, %arg9: memref<16x128xf32, #tpu.memory_space<vmem>>) attributes {dimension_semantics = [#tpu.dimension_semantics<parallel>], iteration_bounds = array<i64: 2>, scalar_prefetch = 0 : i64, scratch_operands = 1 : i64, tpu.core_type = #tpu.core_type<tc>, window_params = [{transform_indices = @transform_0, window_bounds = array<i64: 1, 16, 64>}, {pipeline_mode = #tpu.pipeline_mode<synchronous>, transform_indices = @transform_1, window_bounds = array<i64: 3, 64, 128>}, {transform_indices = @transform_2, window_bounds = array<i64: 1, 16, 128>}, {transform_indices = @transform_3, window_bounds = array<i64: 1, 16, 128>}, {pipeline_mode = #tpu.pipeline_mode<synchronous>, transform_indices = @transform_4, window_bounds = array<i64: 1, 128>}, {pipeline_mode = #tpu.pipeline_mode<synchronous>, transform_indices = @transform_5, window_bounds = array<i64: 1, 128>}, {transform_indices = @transform_6, window_bounds = array<i64: 1, 16, 128>}, {transform_indices = @transform_7, window_bounds = array<i64: 1, 16, 128>}]} {
    %c0 = arith.constant 0 : index
    %c0_0 = arith.constant 0 : index
    %0 = vector.load %arg5[%c0, %c0_0] : memref<1x128xf32, #tpu.memory_space<vmem>>, vector<1x128xf32>
    %c0_1 = arith.constant 0 : index
    %c0_2 = arith.constant 0 : index
    %1 = vector.load %arg6[%c0_1, %c0_2] : memref<1x128xf32, #tpu.memory_space<vmem>>, vector<1x128xf32>
    %cst = arith.constant 0.000000e+00 : f32
    %2 = vector.broadcast %cst : f32 to vector<16x128xf32>
    %c0_3 = arith.constant 0 : index
    %c0_4 = arith.constant 0 : index
    %3 = vector.load %arg9[%c0_3, %c0_4] : memref<16x128xf32, #tpu.memory_space<vmem>>, vector<16x128xf32>
    tpu.vector_store %arg9[%c0_3, %c0_4], %2 {strides = array<i32>} : memref<16x128xf32, #tpu.memory_space<vmem>>, vector<16x128xf32>,
    %c0_5 = arith.constant 0 : index
    %c0_6 = arith.constant 0 : index
    %c0_7 = arith.constant 0 : index
    %4 = vector.load %arg1[%c0_5, %c0_6, %c0_7] : memref<1x16x64xf32, #tpu.memory_space<vmem>>, vector<1x15x64xf32>
    %5 = vector.shape_cast %4 : vector<1x15x64xf32> to vector<15x64xf32>
    %c0_8 = arith.constant 0 : index
    %c0_9 = arith.constant 0 : index
    %c0_10 = arith.constant 0 : index
    %6 = vector.load %arg2[%c0_8, %c0_9, %c0_10] : memref<3x64x128xf32, #tpu.memory_space<vmem>>, vector<1x64x128xf32>
    %7 = vector.shape_cast %6 : vector<1x64x128xf32> to vector<64x128xf32>
    %cst_11 = arith.constant dense<0.000000e+00> : vector<15x128xf32>
    %8 = tpu.matmul %5, %7, %cst_11 {dimension_numbers = #tpu.dot_dimension_numbers<[1], [0], [0], [1], [0, 0, 1, 1], [], []>} : vector<15x64xf32>, vector<64x128xf32>, vector<15x128xf32> -> vector<15x128xf32>
    %c1 = arith.constant 1 : index
    %c0_12 = arith.constant 0 : index
    %9 = vector.load %arg9[%c1, %c0_12] : memref<16x128xf32, #tpu.memory_space<vmem>>, vector<15x128xf32>
    %10 = arith.addf %9, %8 : vector<15x128xf32>
    %c1_13 = arith.constant 1 : index
    %c0_14 = arith.constant 0 : index
    %11 = vector.load %arg9[%c1_13, %c0_14] : memref<16x128xf32, #tpu.memory_space<vmem>>, vector<15x128xf32>
    tpu.vector_store %arg9[%c1_13, %c0_14], %10 {strides = array<i32>} : memref<16x128xf32, #tpu.memory_space<vmem>>, vector<15x128xf32>,
    %c0_15 = arith.constant 0 : index
    %c0_16 = arith.constant 0 : index
    %c0_17 = arith.constant 0 : index
    %12 = vector.load %arg1[%c0_15, %c0_16, %c0_17] : memref<1x16x64xf32, #tpu.memory_space<vmem>>, vector<1x16x64xf32>
    %13 = vector.shape_cast %12 : vector<1x16x64xf32> to vector<16x64xf32>
    %c1_18 = arith.constant 1 : index
    %c0_19 = arith.constant 0 : index
    %c0_20 = arith.constant 0 : index
    %14 = vector.load %arg2[%c1_18, %c0_19, %c0_20] : memref<3x64x128xf32, #tpu.memory_space<vmem>>, vector<1x64x128xf32>
    %15 = vector.shape_cast %14 : vector<1x64x128xf32> to vector<64x128xf32>
    %cst_21 = arith.constant dense<0.000000e+00> : vector<16x128xf32>
    %16 = tpu.matmul %13, %15, %cst_21 {dimension_numbers = #tpu.dot_dimension_numbers<[1], [0], [0], [1], [0, 0, 1, 1], [], []>} : vector<16x64xf32>, vector<64x128xf32>, vector<16x128xf32> -> vector<16x128xf32>
    %c0_22 = arith.constant 0 : index
    %c0_23 = arith.constant 0 : index
    %17 = vector.load %arg9[%c0_22, %c0_23] : memref<16x128xf32, #tpu.memory_space<vmem>>, vector<16x128xf32>
    %18 = arith.addf %17, %16 : vector<16x128xf32>
    %c0_24 = arith.constant 0 : index
    %c0_25 = arith.constant 0 : index
    %19 = vector.load %arg9[%c0_24, %c0_25] : memref<16x128xf32, #tpu.memory_space<vmem>>, vector<16x128xf32>
    tpu.vector_store %arg9[%c0_24, %c0_25], %18 {strides = array<i32>} : memref<16x128xf32, #tpu.memory_space<vmem>>, vector<16x128xf32>,
    %c0_26 = arith.constant 0 : index
    %c1_27 = arith.constant 1 : index
    %c0_28 = arith.constant 0 : index
    %20 = vector.load %arg1[%c0_26, %c1_27, %c0_28] : memref<1x16x64xf32, #tpu.memory_space<vmem>>, vector<1x15x64xf32>
    %21 = vector.shape_cast %20 : vector<1x15x64xf32> to vector<15x64xf32>
    %c2 = arith.constant 2 : index
    %c0_29 = arith.constant 0 : index
    %c0_30 = arith.constant 0 : index
    %22 = vector.load %arg2[%c2, %c0_29, %c0_30] : memref<3x64x128xf32, #tpu.memory_space<vmem>>, vector<1x64x128xf32>
    %23 = vector.shape_cast %22 : vector<1x64x128xf32> to vector<64x128xf32>
    %cst_31 = arith.constant dense<0.000000e+00> : vector<15x128xf32>
    %24 = tpu.matmul %21, %23, %cst_31 {dimension_numbers = #tpu.dot_dimension_numbers<[1], [0], [0], [1], [0, 0, 1, 1], [], []>} : vector<15x64xf32>, vector<64x128xf32>, vector<15x128xf32> -> vector<15x128xf32>
    %c0_32 = arith.constant 0 : index
    %c0_33 = arith.constant 0 : index
    %25 = vector.load %arg9[%c0_32, %c0_33] : memref<16x128xf32, #tpu.memory_space<vmem>>, vector<15x128xf32>
    %26 = arith.addf %25, %24 : vector<15x128xf32>
    %c0_34 = arith.constant 0 : index
    %c0_35 = arith.constant 0 : index
    %27 = vector.load %arg9[%c0_34, %c0_35] : memref<16x128xf32, #tpu.memory_space<vmem>>, vector<15x128xf32>
    tpu.vector_store %arg9[%c0_34, %c0_35], %26 {strides = array<i32>} : memref<16x128xf32, #tpu.memory_space<vmem>>, vector<15x128xf32>,
    %c0_36 = arith.constant 0 : index
    %c0_37 = arith.constant 0 : index
    %28 = vector.load %arg9[%c0_36, %c0_37] : memref<16x128xf32, #tpu.memory_space<vmem>>, vector<16x128xf32>
    %c0_38 = arith.constant 0 : index
    %c0_39 = arith.constant 0 : index
    %c0_40 = arith.constant 0 : index
    %29 = vector.load %arg3[%c0_38, %c0_39, %c0_40] : memref<1x16x128xf32, #tpu.memory_space<vmem>>, vector<1x16x128xf32>
    %30 = vector.shape_cast %29 : vector<1x16x128xf32> to vector<16x128xf32>
    %c0_41 = arith.constant 0 : index
    %c0_42 = arith.constant 0 : index
    %c0_43 = arith.constant 0 : index
    %31 = vector.load %arg4[%c0_41, %c0_42, %c0_43] : memref<1x16x128xf32, #tpu.memory_space<vmem>>, vector<1x16x128xf32>
    %32 = vector.shape_cast %31 : vector<1x16x128xf32> to vector<16x128xf32>
    %33 = vector.broadcast %0 : vector<1x128xf32> to vector<16x128xf32>
    %34 = arith.mulf %30, %33 : vector<16x128xf32>
    %cst_44 = arith.constant 1.000000e+00 : f32
    %35 = vector.broadcast %cst_44 : f32 to vector<16x128xf32>
    %36 = arith.subf %35, %32 : vector<16x128xf32>
    %37 = arith.mulf %34, %36 : vector<16x128xf32>
    %cst_45 = arith.constant 1.000000e+00 : f32
    %38 = vector.broadcast %cst_45 : f32 to vector<1x128xf32>
    %39 = arith.subf %38, %0 : vector<1x128xf32>
    %40 = vector.broadcast %39 : vector<1x128xf32> to vector<16x128xf32>
    %41 = arith.mulf %40, %28 : vector<16x128xf32>
    %42 = arith.addf %37, %41 : vector<16x128xf32>
    %43 = vector.broadcast %1 : vector<1x128xf32> to vector<16x128xf32>
    %44 = arith.cmpf ogt, %42, %43 : vector<16x128xf32>
    %45 = arith.extui %44 : vector<16x128xi1> to vector<16x128xi32>
    %46 = arith.sitofp %45 : vector<16x128xi32> to vector<16x128xf32>
    %c0_46 = arith.constant 0 : index
    %c0_47 = arith.constant 0 : index
    %c0_48 = arith.constant 0 : index
    %47 = vector.load %arg7[%c0_46, %c0_47, %c0_48] : memref<1x16x128xf32, #tpu.memory_space<vmem>>, vector<1x16x128xf32>
    %48 = vector.shape_cast %47 : vector<1x16x128xf32> to vector<16x128xf32>
    %49 = vector.shape_cast %42 : vector<16x128xf32> to vector<1x16x128xf32>
    tpu.vector_store %arg7[%c0_46, %c0_47, %c0_48], %49 {strides = array<i32>} : memref<1x16x128xf32, #tpu.memory_space<vmem>>, vector<1x16x128xf32>,
    %c0_49 = arith.constant 0 : index
    %c0_50 = arith.constant 0 : index
    %c0_51 = arith.constant 0 : index
    %50 = vector.load %arg8[%c0_49, %c0_50, %c0_51] : memref<1x16x128xf32, #tpu.memory_space<vmem>>, vector<1x16x128xf32>
    %51 = vector.shape_cast %50 : vector<1x16x128xf32> to vector<16x128xf32>
    %52 = vector.shape_cast %46 : vector<16x128xf32> to vector<1x16x128xf32>
    tpu.vector_store %arg8[%c0_49, %c0_50, %c0_51], %52 {strides = array<i32>} : memref<1x16x128xf32, #tpu.memory_space<vmem>>, vector<1x16x128xf32>,
    return
  }
  func.func @transform_0(%arg0: i32) -> (i32, i32, i32) {
    %c0_i32 = arith.constant 0 : i32
    %c0_i32_0 = arith.constant 0 : i32
    %c0_i32_1 = arith.constant 0 : i32
    return %arg0, %c0_i32, %c0_i32_0 : i32, i32, i32
  }
  func.func @transform_1(%arg0: i32) -> (i32, i32, i32) {
    %c0_i32 = arith.constant 0 : i32
    %c0_i32_0 = arith.constant 0 : i32
    %c0_i32_1 = arith.constant 0 : i32
    %c0_i32_2 = arith.constant 0 : i32
    return %c0_i32, %c0_i32_0, %c0_i32_1 : i32, i32, i32
  }
  func.func @transform_2(%arg0: i32) -> (i32, i32, i32) {
    %c0_i32 = arith.constant 0 : i32
    %c0_i32_0 = arith.constant 0 : i32
    %c0_i32_1 = arith.constant 0 : i32
    return %arg0, %c0_i32, %c0_i32_0 : i32, i32, i32
  }
  func.func @transform_3(%arg0: i32) -> (i32, i32, i32) {
    %c0_i32 = arith.constant 0 : i32
    %c0_i32_0 = arith.constant 0 : i32
    %c0_i32_1 = arith.constant 0 : i32
    return %arg0, %c0_i32, %c0_i32_0 : i32, i32, i32
  }
  func.func @transform_4(%arg0: i32) -> (i32, i32) {
    %c0_i32 = arith.constant 0 : i32
    %c0_i32_0 = arith.constant 0 : i32
    %c0_i32_1 = arith.constant 0 : i32
    return %c0_i32, %c0_i32_0 : i32, i32
  }
  func.func @transform_5(%arg0: i32) -> (i32, i32) {
    %c0_i32 = arith.constant 0 : i32
    %c0_i32_0 = arith.constant 0 : i32
    %c0_i32_1 = arith.constant 0 : i32
    return %c0_i32, %c0_i32_0 : i32, i32
  }
  func.func @transform_6(%arg0: i32) -> (i32, i32, i32) {
    %c0_i32 = arith.constant 0 : i32
    %c0_i32_0 = arith.constant 0 : i32
    %c0_i32_1 = arith.constant 0 : i32
    return %arg0, %c0_i32, %c0_i32_0 : i32, i32, i32
  }
  func.func @transform_7(%arg0: i32) -> (i32, i32, i32) {
    %c0_i32 = arith.constant 0 : i32
    %c0_i32_0 = arith.constant 0 : i32
    %c0_i32_1 = arith.constant 0 : i32
    return %arg0, %c0_i32, %c0_i32_0 : i32, i32, i32
  }
}

</mosaic_0001>

<llo_original>
// kernel: tpu_custom_call.1
$region0: #{tpu_custom_call.1}
  #allocation0 [shape = 'u32[]', space=smem, size = 0x4, offset = 0x4, fixed_abs, tag = 'smem constant byte address 0x4 - core index']
  #allocation1 [shape = 'u32[72,128]{1,0:T(1,128)}', space=vmem, size = 0x9000, scoped, tag = 'internal scratch']
  #allocation2 [shape = 'f32[16,128]{1,0:T(8,128)}', space=vmem, size = 0x2000, scoped, tag = 'scratch operand']
  %s0 = inlined_call_operand.hbm [shape: f32[2,16,64], index: 0, kind: input, shape index: {}]
  %s1 = inlined_call_operand.hbm [shape: f32[3,64,128], index: 1, kind: input, shape index: {}]
  %s2 = inlined_call_operand.hbm [shape: f32[2,16,128], index: 2, kind: input, shape index: {}]
  %s3 = inlined_call_operand.hbm [shape: f32[2,16,128], index: 3, kind: input, shape index: {}]
  %s4 = inlined_call_operand.vmem [shape: f32[1,128], index: 4, kind: input, shape index: {}]
  %s5 = inlined_call_operand.vmem [shape: f32[1,128], index: 5, kind: input, shape index: {}]
  %s6 = inlined_call_operand.hbm [shape: f32[2,16,128], index: 6, kind: output, shape index: {0}]
  %s7 = inlined_call_operand.hbm [shape: f32[2,16,128], index: 7, kind: output, shape index: {1}]
  %8 = xla_tuple %s6, %s7
  %s9 = sld [smem:[#allocation0]]
  $region81: #{tpu_custom_call.1} parent=0
    _
  %s11 = ssub.s32 1, %s9
  %s12 = scalar_select 0, %s11, %s9
  $region1: #{tpu_custom_call.1} parent=0
    #allocation3 [shape = 'u8[16384]{0}', space=vmem, size = 0x4000, scoped, tag = 'input window, operand 0']
    #allocation4 [shape = 's32[2]{0}', space=sflag, size = 0x8, scoped, tag = 'scoped memory for tpu_custom_call.1']
    #allocation5 [shape = 's32[2]{0}', space=sflag, size = 0x8, scoped, tag = 'scoped memory for tpu_custom_call.1']
    #allocation6 [shape = 'u8[98304]{0}', space=vmem, size = 0x18000, scoped, tag = 'input window, operand 1, single buffered']
    #allocation7 [shape = 's32[1]{0}', space=sflag, size = 0x4, scoped, tag = 'scoped memory for tpu_custom_call.1']
    #allocation8 [shape = 'u8[16384]{0}', space=vmem, size = 0x4000, scoped, tag = 'input window, operand 2']
    #allocation9 [shape = 'u8[16384]{0}', space=vmem, size = 0x4000, scoped, tag = 'input window, operand 3']
    #allocation10 [shape = 'u8[16384]{0}', space=vmem, size = 0x4000, scoped, tag = 'output window, operand 0']
    #allocation11 [shape = 'u8[16384]{0}', space=vmem, size = 0x4000, scoped, tag = 'output window, operand 1']
    #allocation12 [shape = 's32[2]{0}', space=sflag, size = 0x8, scoped, tag = 'scoped memory for tpu_custom_call.1']
    %13 = vsyncpa [#allocation4], 0
    %s14 = scalar_lea.sflag [#allocation4], 1
    %15 = vsyncpa %s14, 0
    %16 = vsyncpa [#allocation7], 0
    %17 = vsyncpa [#allocation5], 0
    %s18 = scalar_lea.sflag [#allocation5], 1
    %19 = vsyncpa %s18, 0
    %20 = vsyncpa [#allocation12], 0
    %s21 = scalar_lea.sflag [#allocation12], 1
    %22 = vsyncpa %s21, 0
    loop: start=0, step=1, limit=4
    $region2: #{tpu_custom_call.1} parent=1 // loop_pre_header
      _
    $region3: #{tpu_custom_call.1} parent=1 // loop_header
      %s24 = sphi 0, %s28
      %p25 = scmp.ge.s32.totalorder %s24, 4
      %s34 = sphi 0, %s36
      %s37 = sphi 0, %s34
      %s38 = sphi 0, %s37
      %s54 = sphi 0, %s38
      %s58 = sphi 0, %s58
      %s60 = sphi 0, %s58
      %s61 = sphi 0, %s60
      %s75 = sphi 0, %s61
      %s81 = sphi 0, %s83
      %s84 = sphi 0, %s81
      %s85 = sphi 0, %s84
      %s101 = sphi 0, %s85
      %s107 = sphi 0, %s109
      %s110 = sphi 0, %s107
      %s111 = sphi 0, %s110
      %s127 = sphi 0, %s111
      %s131 = sphi 0, %s131
      %s133 = sphi 0, %s131
      %s134 = sphi 0, %s133
      %s148 = sphi 0, %s134
      %s152 = sphi 0, %s152
      %s154 = sphi 0, %s152
      %s155 = sphi 0, %s154
      %s169 = sphi 0, %s155
      %s175 = sphi 0, %s177
      %s178 = sphi 0, %s175
      %s179 = sphi 0, %s178
      %s195 = sphi 0, %s179
      %s201 = sphi 0, %s203
      %s204 = sphi 0, %s201
      %s205 = sphi 0, %s204
      %s221 = sphi 0, %s205
    $region4: #{tpu_custom_call.1} parent=1 // loop_header_branch
      %27 = sbr.rel (%p25) target = $region8
    $region5: #{tpu_custom_call.1} parent=1 // loop_body
      %s29 = ssub.s32 %s24, 1
      %s30 = ssub.s32 %s24, 2
      %s31 = sadd.s32 %s24, 1
      %s32 = ssub.s32 %s24, %s31
      %p33 = scmp.eq.s32.totalorder %s32, 0
      %s35 = sadd.s32 %s34, 1
      %s36 = scalar_select %p33, %s34, %s35
      %p39 = pneg %p33
      %p40 = scmp.eq.s32.totalorder %s24, 1
      %p41 = por %p39, %p40
      %p42 = scmp.ne.s32.totalorder %s34, %s37
      %p43 = scmp.eq.s32.totalorder %s24, 0
      %p44 = por %p42, %p43
      %p45 = scmp.ne.s32.totalorder %s34, %s37
      %p46 = scmp.eq.s32.totalorder %s29, 1
      %p47 = por %p45, %p46
      %p48 = scmp.ne.s32.totalorder %s37, %s38
      %p49 = scmp.eq.s32.totalorder %s29, 0
      %p50 = por %p48, %p49
      %p51 = scmp.ne.s32.totalorder %s37, %s38
      %p52 = scmp.eq.s32.totalorder %s30, 1
      %p53 = por %p51, %p52
      %p55 = scmp.ne.s32.totalorder %s38, %s54
      %p56 = scmp.eq.s32.totalorder %s30, 0
      %p57 = por %p55, %p56
      %s59 = sadd.s32 %s58, 1
      %p62 = scmp.eq.s32.totalorder %s24, 1
      %p63 = scmp.ne.s32.totalorder %s58, %s60
      %p64 = scmp.eq.s32.totalorder %s24, 0
      %p65 = por %p63, %p64
      %p66 = scmp.ne.s32.totalorder %s58, %s60
      %p67 = scmp.eq.s32.totalorder %s29, 1
      %p68 = por %p66, %p67
      %p69 = scmp.ne.s32.totalorder %s60, %s61
      %p70 = scmp.eq.s32.totalorder %s29, 0
      %p71 = por %p69, %p70
      %p72 = scmp.ne.s32.totalorder %s60, %s61
      %p73 = scmp.eq.s32.totalorder %s30, 1
      %p74 = por %p72, %p73
      %p76 = scmp.ne.s32.totalorder %s61, %s75
      %p77 = scmp.eq.s32.totalorder %s30, 0
      %p78 = por %p76, %p77
      %s79 = ssub.s32 %s24, %s31
      %p80 = scmp.eq.s32.totalorder %s79, 0
      %s82 = sadd.s32 %s81, 1
      %s83 = scalar_select %p80, %s81, %s82
      %p86 = pneg %p80
      %p87 = scmp.eq.s32.totalorder %s24, 1
      %p88 = por %p86, %p87
      %p89 = scmp.ne.s32.totalorder %s81, %s84
      %p90 = scmp.eq.s32.totalorder %s24, 0
      %p91 = por %p89, %p90
      %p92 = scmp.ne.s32.totalorder %s81, %s84
      %p93 = scmp.eq.s32.totalorder %s29, 1
      %p94 = por %p92, %p93
      %p95 = scmp.ne.s32.totalorder %s84, %s85
      %p96 = scmp.eq.s32.totalorder %s29, 0
      %p97 = por %p95, %p96
      %p98 = scmp.ne.s32.totalorder %s84, %s85
      %p99 = scmp.eq.s32.totalorder %s30, 1
      %p100 = por %p98, %p99
      %p102 = scmp.ne.s32.totalorder %s85, %s101
      %p103 = scmp.eq.s32.totalorder %s30, 0
      %p104 = por %p102, %p103
      %s105 = ssub.s32 %s24, %s31
      %p106 = scmp.eq.s32.totalorder %s105, 0
      %s108 = sadd.s32 %s107, 1
      %s109 = scalar_select %p106, %s107, %s108
      %p112 = pneg %p106
      %p113 = scmp.eq.s32.totalorder %s24, 1
      %p114 = por %p112, %p113
      %p115 = scmp.ne.s32.totalorder %s107, %s110
      %p116 = scmp.eq.s32.totalorder %s24, 0
      %p117 = por %p115, %p116
      %p118 = scmp.ne.s32.totalorder %s107, %s110
      %p119 = scmp.eq.s32.totalorder %s29, 1
      %p120 = por %p118, %p119
      %p121 = scmp.ne.s32.totalorder %s110, %s111
      %p122 = scmp.eq.s32.totalorder %s29, 0
      %p123 = por %p121, %p122
      %p124 = scmp.ne.s32.totalorder %s110, %s111
      %p125 = scmp.eq.s32.totalorder %s30, 1
      %p126 = por %p124, %p125
      %p128 = scmp.ne.s32.totalorder %s111, %s127
      %p129 = scmp.eq.s32.totalorder %s30, 0
      %p130 = por %p128, %p129
      %s132 = sadd.s32 %s131, 1
      %p135 = scmp.eq.s32.totalorder %s24, 1
      %p136 = scmp.ne.s32.totalorder %s131, %s133
      %p137 = scmp.eq.s32.totalorder %s24, 0
      %p138 = por %p136, %p137
      %p139 = scmp.ne.s32.totalorder %s131, %s133
      %p140 = scmp.eq.s32.totalorder %s29, 1
      %p141 = por %p139, %p140
      %p142 = scmp.ne.s32.totalorder %s133, %s134
      %p143 = scmp.eq.s32.totalorder %s29, 0
      %p144 = por %p142, %p143
      %p145 = scmp.ne.s32.totalorder %s133, %s134
      %p146 = scmp.eq.s32.totalorder %s30, 1
      %p147 = por %p145, %p146
      %p149 = scmp.ne.s32.totalorder %s134, %s148
      %p150 = scmp.eq.s32.totalorder %s30, 0
      %p151 = por %p149, %p150
      %s153 = sadd.s32 %s152, 1
      %p156 = scmp.eq.s32.totalorder %s24, 1
      %p157 = scmp.ne.s32.totalorder %s152, %s154
      %p158 = scmp.eq.s32.totalorder %s24, 0
      %p159 = por %p157, %p158
      %p160 = scmp.ne.s32.totalorder %s152, %s154
      %p161 = scmp.eq.s32.totalorder %s29, 1
      %p162 = por %p160, %p161
      %p163 = scmp.ne.s32.totalorder %s154, %s155
      %p164 = scmp.eq.s32.totalorder %s29, 0
      %p165 = por %p163, %p164
      %p166 = scmp.ne.s32.totalorder %s154, %s155
      %p167 = scmp.eq.s32.totalorder %s30, 1
      %p168 = por %p166, %p167
      %p170 = scmp.ne.s32.totalorder %s155, %s169
      %p171 = scmp.eq.s32.totalorder %s30, 0
      %p172 = por %p170, %p171
      %s173 = ssub.s32 %s24, %s31
      %p174 = scmp.eq.s32.totalorder %s173, 0
      %s176 = sadd.s32 %s175, 1
      %s177 = scalar_select %p174, %s175, %s176
      %p180 = pneg %p174
      %p181 = scmp.eq.s32.totalorder %s24, 1
      %p182 = por %p180, %p181
      %p183 = scmp.ne.s32.totalorder %s175, %s178
      %p184 = scmp.eq.s32.totalorder %s24, 0
      %p185 = por %p183, %p184
      %p186 = scmp.ne.s32.totalorder %s175, %s178
      %p187 = scmp.eq.s32.totalorder %s29, 1
      %p188 = por %p186, %p187
      %p189 = scmp.ne.s32.totalorder %s178, %s179
      %p190 = scmp.eq.s32.totalorder %s29, 0
      %p191 = por %p189, %p190
      %p192 = scmp.ne.s32.totalorder %s178, %s179
      %p193 = scmp.eq.s32.totalorder %s30, 1
      %p194 = por %p192, %p193
      %p196 = scmp.ne.s32.totalorder %s179, %s195
      %p197 = scmp.eq.s32.totalorder %s30, 0
      %p198 = por %p196, %p197
      %s199 = ssub.s32 %s24, %s31
      %p200 = scmp.eq.s32.totalorder %s199, 0
      %s202 = sadd.s32 %s201, 1
      %s203 = scalar_select %p200, %s201, %s202
      %p206 = pneg %p200
      %p207 = scmp.eq.s32.totalorder %s24, 1
      %p208 = por %p206, %p207
      %p209 = scmp.ne.s32.totalorder %s201, %s204
      %p210 = scmp.eq.s32.totalorder %s24, 0
      %p211 = por %p209, %p210
      %p212 = scmp.ne.s32.totalorder %s201, %s204
      %p213 = scmp.eq.s32.totalorder %s29, 1
      %p214 = por %p212, %p213
      %p215 = scmp.ne.s32.totalorder %s204, %s205
      %p216 = scmp.eq.s32.totalorder %s29, 0
      %p217 = por %p215, %p216
      %p218 = scmp.ne.s32.totalorder %s204, %s205
      %p219 = scmp.eq.s32.totalorder %s30, 1
      %p220 = por %p218, %p219
      %p222 = scmp.ne.s32.totalorder %s205, %s221
      %p223 = scmp.eq.s32.totalorder %s30, 0
      %p224 = por %p222, %p223
      %p225 = scmp.le.s32.totalorder 1, %s24
      %p226 = scmp.lt.s32.totalorder %s24, 3
      %p227 = pnand %p225, %p226
      %p228 = pneg %p227
      // Predicated region
      $region9: #{tpu_custom_call.1} parent=5 // pred_check
        _
      $region10: #{tpu_custom_call.1} parent=5 // pred_check_branch
        %230 = sbr.rel (%p227) target = $region12
      $region11: #{tpu_custom_call.1} parent=5 // pred_region
        %s231 = ssub.s32 %s24, 1
        // Predicated region
        $region13: #{tpu_custom_call.1} parent=11 // pred_check
          %p232 = pneg %p71
        $region14: #{tpu_custom_call.1} parent=11 // pred_check_branch
          %234 = sbr.rel (%p232) target = $region16
        $region15: #{tpu_custom_call.1} parent=11 // pred_region
          %236 = vsyncadd [#allocation7], 0
          %s237 = sshll.u32 %s1, 4
          %s238 = int_to_ptr.hbm [resolvable:$true] %s237
          %s239 = sshll.u32 [#allocation6], 4
          %s240 = int_to_ptr.vmem [resolvable:$true] %s239
          %245 = dma.hbm_to_vmem [thread:$0]  %s238, 3072, %s240, [#allocation7], 128, 128, 8
        $region16: #{tpu_custom_call.1} parent=11 // pred_fallthru
          _
        // Predicated region
        $region17: #{tpu_custom_call.1} parent=11 // pred_check
          %p246 = pneg %p144
        $region18: #{tpu_custom_call.1} parent=11 // pred_check_branch
          %248 = sbr.rel (%p246) target = $region20
        $region19: #{tpu_custom_call.1} parent=11 // pred_region
          _
        $region20: #{tpu_custom_call.1} parent=11 // pred_fallthru
          _
        // Predicated region
        $region21: #{tpu_custom_call.1} parent=11 // pred_check
          %p249 = pneg %p165
        $region22: #{tpu_custom_call.1} parent=11 // pred_check_branch
          %251 = sbr.rel (%p249) target = $region24
        $region23: #{tpu_custom_call.1} parent=11 // pred_region
          _
        $region24: #{tpu_custom_call.1} parent=11 // pred_fallthru
          _
      $region12: #{tpu_custom_call.1} parent=5 // pred_fallthru
        _
      %p252 = scmp.lt.s32.totalorder %s24, 2
      // Predicated region
      $region25: #{tpu_custom_call.1} parent=5 // pred_check
        %p253 = pneg %p252
      $region26: #{tpu_custom_call.1} parent=5 // pred_check_branch
        %255 = sbr.rel (%p253) target = $region28
      $region27: #{tpu_custom_call.1} parent=5 // pred_region
        // Predicated region
        $region29: #{tpu_custom_call.1} parent=27 // pred_check
          %p256 = pneg %p44
        $region30: #{tpu_custom_call.1} parent=27 // pred_check_branch
          %258 = sbr.rel (%p256) target = $region32
        $region31: #{tpu_custom_call.1} parent=27 // pred_region
          %s259 = sand.u32 %s24, 1
          %s260 = scalar_lea.sflag [#allocation4], %s259
          %s261 = sand.u32 %s34, 1
          %s262 = smul.addr %s261, 16
          %s263 = scalar_lea.vmem [#allocation3], %s262
          %265 = vsyncadd %s260, 0
          %s266 = smul.addr %s24, 2
          %s267 = smul.addr %s266, 8
          %s268 = scalar_lea.hbm %s0, %s267
          %s269 = sshll.u32 %s268, 4
          %s270 = int_to_ptr.hbm [resolvable:$true] %s269
          %s271 = sshll.u32 %s263, 4
          %s272 = int_to_ptr.vmem [resolvable:$true] %s271
          %277 = dma.hbm_to_vmem [thread:$0]  %s270, 256, %s272, %s260, 128, 128, 8
        $region32: #{tpu_custom_call.1} parent=27 // pred_fallthru
          _
        // Predicated region
        $region33: #{tpu_custom_call.1} parent=27 // pred_check
          %p278 = pneg %p91
        $region34: #{tpu_custom_call.1} parent=27 // pred_check_branch
          %280 = sbr.rel (%p278) target = $region36
        $region35: #{tpu_custom_call.1} parent=27 // pred_region
          %s281 = sand.u32 %s24, 1
          %s282 = scalar_lea.sflag [#allocation4], %s281
          %s283 = sand.u32 %s81, 1
          %s284 = smul.addr %s283, 16
          %s285 = scalar_lea.vmem [#allocation8], %s284
          %287 = vsyncadd %s282, 0
          %s288 = smul.addr %s24, 2
          %s289 = smul.addr %s288, 8
          %s290 = scalar_lea.hbm %s2, %s289
          %s291 = sshll.u32 %s290, 4
          %s292 = int_to_ptr.hbm [resolvable:$true] %s291
          %s293 = sshll.u32 %s285, 4
          %s294 = int_to_ptr.vmem [resolvable:$true] %s293
          %299 = dma.hbm_to_vmem [thread:$0]  %s292, 256, %s294, %s282, 128, 128, 8
        $region36: #{tpu_custom_call.1} parent=27 // pred_fallthru
          _
        // Predicated region
        $region37: #{tpu_custom_call.1} parent=27 // pred_check
          %p300 = pneg %p117
        $region38: #{tpu_custom_call.1} parent=27 // pred_check_branch
          %302 = sbr.rel (%p300) target = $region40
        $region39: #{tpu_custom_call.1} parent=27 // pred_region
          %s303 = sand.u32 %s24, 1
          %s304 = scalar_lea.sflag [#allocation4], %s303
          %s305 = sand.u32 %s107, 1
          %s306 = smul.addr %s305, 16
          %s307 = scalar_lea.vmem [#allocation9], %s306
          %309 = vsyncadd %s304, 0
          %s310 = smul.addr %s24, 2
          %s311 = smul.addr %s310, 8
          %s312 = scalar_lea.hbm %s3, %s311
          %s313 = sshll.u32 %s312, 4
          %s314 = int_to_ptr.hbm [resolvable:$true] %s313
          %s315 = sshll.u32 %s307, 4
          %s316 = int_to_ptr.vmem [resolvable:$true] %s315
          %321 = dma.hbm_to_vmem [thread:$0]  %s314, 256, %s316, %s304, 128, 128, 8
        $region40: #{tpu_custom_call.1} parent=27 // pred_fallthru
          _
      $region28: #{tpu_custom_call.1} parent=5 // pred_fallthru
        _
      %p322 = scmp.le.s32.totalorder 1, %s24
      %p323 = scmp.lt.s32.totalorder %s24, 3
      %p324 = pnand %p322, %p323
      %p325 = pneg %p324
      // Predicated region
      $region41: #{tpu_custom_call.1} parent=5 // pred_check
        _
      $region42: #{tpu_custom_call.1} parent=5 // pred_check_branch
        %327 = sbr.rel (%p324) target = $region44
      $region43: #{tpu_custom_call.1} parent=5 // pred_region
        %s328 = ssub.s32 %s24, 1
        %s329 = sand.u32 %s29, 1
        %s330 = scalar_lea.sflag [#allocation4], %s329
        %s331 = sand.u32 %s37, 1
        %s332 = smul.addr %s331, 16
        %s333 = scalar_lea.vmem [#allocation3], %s332
        // Predicated region
        $region45: #{tpu_custom_call.1} parent=43 // pred_check
          %p334 = pneg %p50
        $region46: #{tpu_custom_call.1} parent=43 // pred_check_branch
          %336 = sbr.rel (%p334) target = $region48
        $region47: #{tpu_custom_call.1} parent=43 // pred_region
          %338 = dma.done %s330, 256
        $region48: #{tpu_custom_call.1} parent=43 // pred_fallthru
          _
        // Predicated region
        $region49: #{tpu_custom_call.1} parent=43 // pred_check
          %p339 = pneg %p71
        $region50: #{tpu_custom_call.1} parent=43 // pred_check_branch
          %341 = sbr.rel (%p339) target = $region52
        $region51: #{tpu_custom_call.1} parent=43 // pred_region
          %343 = dma.done [#allocation7], 3072
        $region52: #{tpu_custom_call.1} parent=43 // pred_fallthru
          _
        %s344 = sand.u32 %s29, 1
        %s345 = scalar_lea.sflag [#allocation4], %s344
        %s346 = sand.u32 %s84, 1
        %s347 = smul.addr %s346, 16
        %s348 = scalar_lea.vmem [#allocation8], %s347
        // Predicated region
        $region53: #{tpu_custom_call.1} parent=43 // pred_check
          %p349 = pneg %p97
        $region54: #{tpu_custom_call.1} parent=43 // pred_check_branch
          %351 = sbr.rel (%p349) target = $region56
        $region55: #{tpu_custom_call.1} parent=43 // pred_region
          %353 = dma.done %s345, 256
        $region56: #{tpu_custom_call.1} parent=43 // pred_fallthru
          _
        %s354 = sand.u32 %s29, 1
        %s355 = scalar_lea.sflag [#allocation4], %s354
        %s356 = sand.u32 %s110, 1
        %s357 = smul.addr %s356, 16
        %s358 = scalar_lea.vmem [#allocation9], %s357
        // Predicated region
        $region57: #{tpu_custom_call.1} parent=43 // pred_check
          %p359 = pneg %p123
        $region58: #{tpu_custom_call.1} parent=43 // pred_check_branch
          %361 = sbr.rel (%p359) target = $region60
        $region59: #{tpu_custom_call.1} parent=43 // pred_region
          %363 = dma.done %s355, 256
        $region60: #{tpu_custom_call.1} parent=43 // pred_fallthru
          _
        %s364 = sand.u32 %s29, 1
        %s365 = scalar_lea.sflag [#allocation4], %s364
        %s366 = sand.u32 %s37, 1
        %s367 = smul.addr %s366, 16
        %s368 = scalar_lea.vmem [#allocation3], %s367
        %p369 = pneg %p50
        %p370 = pneg %p47
        %p371 = pneg %p71
        %p372 = pneg %p68
        %s373 = sand.u32 %s29, 1
        %s374 = scalar_lea.sflag [#allocation4], %s373
        %s375 = sand.u32 %s84, 1
        %s376 = smul.addr %s375, 16
        %s377 = scalar_lea.vmem [#allocation8], %s376
        %p378 = pneg %p97
        %p379 = pneg %p94
        %s380 = sand.u32 %s29, 1
        %s381 = scalar_lea.sflag [#allocation4], %s380
        %s382 = sand.u32 %s110, 1
        %s383 = smul.addr %s382, 16
        %s384 = scalar_lea.vmem [#allocation9], %s383
        %p385 = pneg %p123
        %p386 = pneg %p120
        %p387 = pneg %p144
        %p388 = pneg %p141
        %p389 = pneg %p165
        %p390 = pneg %p162
        %p391 = pneg %p191
        %p392 = pneg %p188
        %s393 = sand.u32 %s178, 1
        %s394 = scalar_lea.sflag [#allocation5], %s393
        %s395 = sand.u32 %s178, 1
        %s396 = smul.addr %s395, 16
        %s397 = scalar_lea.vmem [#allocation10], %s396
        %p398 = pneg %p217
        %p399 = pneg %p214
        %s400 = sand.u32 %s204, 1
        %s401 = scalar_lea.sflag [#allocation12], %s400
        %s402 = sand.u32 %s204, 1
        %s403 = smul.addr %s402, 16
        %s404 = scalar_lea.vmem [#allocation11], %s403
        %v405 = vld [vmem:[%s4] sm:$0x1]
        %v406 = vld [vmem:[%s5] sm:$0x1]
        %407 = vst [vmem:[#allocation2] sm:$0xff] 0.0
        %408 = vst [vmem:[#allocation2 + $0x8] sm:$0xff] 0.0
        %v409 = vld [vmem:[%s333] sm:$0xff]
        %v410 = vld [vmem:[%s333 + $0x8] sm:$0x7f]
        %v411 = vld [vmem:[#allocation6] sm:$0xff]
        %v412 = vld [vmem:[#allocation6 + $0x8] sm:$0xff]
        %v413 = vld [vmem:[#allocation6 + $0x10] sm:$0xff]
        %v414 = vld [vmem:[#allocation6 + $0x18] sm:$0xff]
        %v415 = vld [vmem:[#allocation6 + $0x20] sm:$0xff]
        %v416 = vld [vmem:[#allocation6 + $0x28] sm:$0xff]
        %v417 = vld [vmem:[#allocation6 + $0x30] sm:$0xff]
        %v418 = vld [vmem:[#allocation6 + $0x38] sm:$0xff]
        %vm419 = vcmask 523264
        %v421 = vsel %vm419, %v409, 0
        %v424 = vsel %vm419, %v410, 0
        %426 = vmatpush.msra.mxu0 0.0
        %427 = vmatpush.msra.mxu0 0.0
        %428 = vmatpush.msra.mxu0 0.0
        %429 = vmatpush.msra.mxu0 0.0
        %430 = vmatpush.msra.mxu0 0.0
        %431 = vmatpush.msra.mxu0 0.0
        %432 = vmatpush.msra.mxu0 0.0
        %433 = vmatpush.msra.mxu0 0.0
        %434 = vmatpush.msra.mxu0 %v418
        %435 = vmatpush.msra.mxu0 %v417
        %436 = vmatpush.msra.mxu0 %v416
        %437 = vmatpush.msra.mxu0 %v415
        %438 = vmatpush.msra.mxu0 %v414
        %439 = vmatpush.msra.mxu0 %v413
        %440 = vmatpush.msra.mxu0 %v412
        %441 = vmatpush.msra.mxu0 %v411
        %442 = vmatmul.f32.gmra.mxu0 %v421
        %v443 = vpop.f32.mrf.mxu0
        %v444 = vadd.f32 0.0, %v443
        %445 = vmatmul.f32.gmra.mxu0 %v424
        %v446 = vpop.f32.mrf.mxu0
        %v447 = vadd.f32 0.0, %v446
        %448 = vdwg.mxu0
        %v449 = vld [vmem:[#allocation2 + $0x1] sm:$0xff]
        %v450 = vld [vmem:[#allocation2 + $0x9] sm:$0x7f]
        %v451 = vadd.f32 %v449, %v444
        %v452 = vadd.f32 %v450, %v447
        %453 = vst [vmem:[#allocation2 + $0x1] sm:$0xff] %v451
        %454 = vst [vmem:[#allocation2 + $0x9] sm:$0x7f] %v452
        %v455 = vld [vmem:[%s333] sm:$0xff]
        %v456 = vld [vmem:[%s333 + $0x8] sm:$0xff]
        %s457 = scalar_lea.vmem [#allocation6], 64
        %v458 = vld [vmem:[%s457] sm:$0xff]
        %v459 = vld [vmem:[%s457 + $0x8] sm:$0xff]
        %v460 = vld [vmem:[%s457 + $0x10] sm:$0xff]
        %v461 = vld [vmem:[%s457 + $0x18] sm:$0xff]
        %v462 = vld [vmem:[%s457 + $0x20] sm:$0xff]
        %v463 = vld [vmem:[%s457 + $0x28] sm:$0xff]
        %v464 = vld [vmem:[%s457 + $0x30] sm:$0xff]
        %v465 = vld [vmem:[%s457 + $0x38] sm:$0xff]
        %v467 = vsel %vm419, %v455, 0
        %v470 = vsel %vm419, %v456, 0
        %472 = vmatpush.msra.mxu0 0.0
        %473 = vmatpush.msra.mxu0 0.0
        %474 = vmatpush.msra.mxu0 0.0
        %475 = vmatpush.msra.mxu0 0.0
        %476 = vmatpush.msra.mxu0 0.0
        %477 = vmatpush.msra.mxu0 0.0
        %478 = vmatpush.msra.mxu0 0.0
        %479 = vmatpush.msra.mxu0 0.0
        %480 = vmatpush.msra.mxu0 %v465
        %481 = vmatpush.msra.mxu0 %v464
        %482 = vmatpush.msra.mxu0 %v463
        %483 = vmatpush.msra.mxu0 %v462
        %484 = vmatpush.msra.mxu0 %v461
        %485 = vmatpush.msra.mxu0 %v460
        %486 = vmatpush.msra.mxu0 %v459
        %487 = vmatpush.msra.mxu0 %v458
        %488 = vmatmul.f32.gmra.mxu0 %v467
        %v489 = vpop.f32.mrf.mxu0
        %v490 = vadd.f32 0.0, %v489
        %491 = vmatmul.f32.gmra.mxu0 %v470
        %v492 = vpop.f32.mrf.mxu0
        %v493 = vadd.f32 0.0, %v492
        %494 = vdwg.mxu0
        %v495 = vld [vmem:[#allocation2] sm:$0xff]
        %v496 = vld [vmem:[#allocation2 + $0x8] sm:$0xff]
        %v497 = vadd.f32 %v495, %v490
        %v498 = vadd.f32 %v496, %v493
        %499 = vst [vmem:[#allocation2] sm:$0xff] %v497
        %500 = vst [vmem:[#allocation2 + $0x8] sm:$0xff] %v498
        %v501 = vld [vmem:[%s333 + $0x1] sm:$0xff]
        %v502 = vld [vmem:[%s333 + $0x9] sm:$0x7f]
        %s503 = scalar_lea.vmem [#allocation6], 128
        %v504 = vld [vmem:[%s503] sm:$0xff]
        %v505 = vld [vmem:[%s503 + $0x8] sm:$0xff]
        %v506 = vld [vmem:[%s503 + $0x10] sm:$0xff]
        %v507 = vld [vmem:[%s503 + $0x18] sm:$0xff]
        %v508 = vld [vmem:[%s503 + $0x20] sm:$0xff]
        %v509 = vld [vmem:[%s503 + $0x28] sm:$0xff]
        %v510 = vld [vmem:[%s503 + $0x30] sm:$0xff]
        %v511 = vld [vmem:[%s503 + $0x38] sm:$0xff]
        %v513 = vsel %vm419, %v501, 0
        %v516 = vsel %vm419, %v502, 0
        %518 = vmatpush.msra.mxu0 0.0
        %519 = vmatpush.msra.mxu0 0.0
        %520 = vmatpush.msra.mxu0 0.0
        %521 = vmatpush.msra.mxu0 0.0
        %522 = vmatpush.msra.mxu0 0.0
        %523 = vmatpush.msra.mxu0 0.0
        %524 = vmatpush.msra.mxu0 0.0
        %525 = vmatpush.msra.mxu0 0.0
        %526 = vmatpush.msra.mxu0 %v511
        %527 = vmatpush.msra.mxu0 %v510
        %528 = vmatpush.msra.mxu0 %v509
        %529 = vmatpush.msra.mxu0 %v508
        %530 = vmatpush.msra.mxu0 %v507
        %531 = vmatpush.msra.mxu0 %v506
        %532 = vmatpush.msra.mxu0 %v505
        %533 = vmatpush.msra.mxu0 %v504
        %534 = vmatmul.f32.gmra.mxu0 %v513
        %v535 = vpop.f32.mrf.mxu0
        %v536 = vadd.f32 0.0, %v535
        %537 = vmatmul.f32.gmra.mxu0 %v516
        %v538 = vpop.f32.mrf.mxu0
        %v539 = vadd.f32 0.0, %v538
        %540 = vdwg.mxu0
        %v541 = vld [vmem:[#allocation2] sm:$0xff]
        %v542 = vld [vmem:[#allocation2 + $0x8] sm:$0x7f]
        %v543 = vadd.f32 %v541, %v536
        %v544 = vadd.f32 %v542, %v539
        %545 = vst [vmem:[#allocation2] sm:$0xff] %v543
        %546 = vst [vmem:[#allocation2 + $0x8] sm:$0x7f] %v544
        %v547 = vld [vmem:[#allocation2] sm:$0xff]
        %v548 = vld [vmem:[#allocation2 + $0x8] sm:$0xff]
        %v549 = vld [vmem:[%s348] sm:$0xff]
        %v550 = vld [vmem:[%s348 + $0x8] sm:$0xff]
        %v551 = vld [vmem:[%s358] sm:$0xff]
        %v552 = vld [vmem:[%s358 + $0x8] sm:$0xff]
        %v554 = vperm.slane %v405, 0
        %v556 = vmul.f32 %v549, %v554
        %v557 = vmul.f32 %v550, %v554
        %v558 = vsub.f32 1.0, %v551
        %v559 = vsub.f32 1.0, %v552
        %v560 = vmul.f32 %v556, %v558
        %v561 = vmul.f32 %v557, %v559
        %v562 = vsub.f32 1.0, %v405
        %v564 = vperm.slane %v562, 0
        %v566 = vmul.f32 %v564, %v547
        %v567 = vmul.f32 %v564, %v548
        %v568 = vadd.f32 %v560, %v566
        %v569 = vadd.f32 %v561, %v567
        %v571 = vperm.slane %v406, 0
        %vm573 = vcmp.gt.f32.partialorder %v568, %v571
        %vm574 = vcmp.gt.f32.partialorder %v569, %v571
        %v575 = vsel %vm573, 1, 0
        %v576 = vsel %vm574, 1, 0
        %v577 = vcvt.s32.f32 %v575
        %v578 = vcvt.s32.f32 %v576
        %579 = vst [vmem:[%s397] sm:$0xff] %v568
        %580 = vst [vmem:[%s397 + $0x8] sm:$0xff] %v569
        %581 = vst [vmem:[%s404] sm:$0xff] %v577
        %582 = vst [vmem:[%s404 + $0x8] sm:$0xff] %v578
        %s583 = sand.u32 %s178, 1
        %s584 = scalar_lea.sflag [#allocation5], %s583
        %s585 = sand.u32 %s178, 1
        %s586 = smul.addr %s585, 16
        %s587 = scalar_lea.vmem [#allocation10], %s586
        %s588 = sand.u32 %s204, 1
        %s589 = scalar_lea.sflag [#allocation12], %s588
        %s590 = sand.u32 %s204, 1
        %s591 = smul.addr %s590, 16
        %s592 = scalar_lea.vmem [#allocation11], %s591
        // Predicated region
        $region61: #{tpu_custom_call.1} parent=43 // pred_check
          %p593 = pneg %p188
        $region62: #{tpu_custom_call.1} parent=43 // pred_check_branch
          %595 = sbr.rel (%p593) target = $region64
        $region63: #{tpu_custom_call.1} parent=43 // pred_region
          %597 = vsyncadd %s584, 0
          %s598 = smul.addr %s29, 2
          %s599 = smul.addr %s598, 8
          %s600 = scalar_lea.hbm %s6, %s599
          %s601 = sshll.u32 %s587, 4
          %s602 = int_to_ptr.vmem [resolvable:$true] %s601
          %s603 = sshll.u32 %s600, 4
          %s604 = int_to_ptr.hbm [resolvable:$true] %s603
          %609 = dma.vmem_to_hbm [thread:$0]  %s602, 256, %s604, %s584, 128, 128, 8
        $region64: #{tpu_custom_call.1} parent=43 // pred_fallthru
          _
        // Predicated region
        $region65: #{tpu_custom_call.1} parent=43 // pred_check
          %p610 = pneg %p214
        $region66: #{tpu_custom_call.1} parent=43 // pred_check_branch
          %612 = sbr.rel (%p610) target = $region68
        $region67: #{tpu_custom_call.1} parent=43 // pred_region
          %614 = vsyncadd %s589, 0
          %s615 = smul.addr %s29, 2
          %s616 = smul.addr %s615, 8
          %s617 = scalar_lea.hbm %s7, %s616
          %s618 = sshll.u32 %s592, 4
          %s619 = int_to_ptr.vmem [resolvable:$true] %s618
          %s620 = sshll.u32 %s617, 4
          %s621 = int_to_ptr.hbm [resolvable:$true] %s620
          %626 = dma.vmem_to_hbm [thread:$0]  %s619, 256, %s621, %s589, 128, 128, 8
        $region68: #{tpu_custom_call.1} parent=43 // pred_fallthru
          _
      $region44: #{tpu_custom_call.1} parent=5 // pred_fallthru
        _
      %p627 = scmp.le.s32.totalorder 2, %s24
      // Predicated region
      $region69: #{tpu_custom_call.1} parent=5 // pred_check
        %p628 = pneg %p627
      $region70: #{tpu_custom_call.1} parent=5 // pred_check_branch
        %630 = sbr.rel (%p628) target = $region72
      $region71: #{tpu_custom_call.1} parent=5 // pred_region
        %s631 = ssub.s32 %s24, 2
        // Predicated region
        $region73: #{tpu_custom_call.1} parent=71 // pred_check
          %p632 = pneg %p194
        $region74: #{tpu_custom_call.1} parent=71 // pred_check_branch
          %634 = sbr.rel (%p632) target = $region76
        $region75: #{tpu_custom_call.1} parent=71 // pred_region
          %s635 = sand.u32 %s179, 1
          %s636 = scalar_lea.sflag [#allocation5], %s635
          %s637 = sand.u32 %s179, 1
          %s638 = smul.addr %s637, 16
          %s639 = scalar_lea.vmem [#allocation10], %s638
          %641 = dma.done %s636, 256
        $region76: #{tpu_custom_call.1} parent=71 // pred_fallthru
          _
        // Predicated region
        $region77: #{tpu_custom_call.1} parent=71 // pred_check
          %p642 = pneg %p220
        $region78: #{tpu_custom_call.1} parent=71 // pred_check_branch
          %644 = sbr.rel (%p642) target = $region80
        $region79: #{tpu_custom_call.1} parent=71 // pred_region
          %s645 = sand.u32 %s205, 1
          %s646 = scalar_lea.sflag [#allocation12], %s645
          %s647 = sand.u32 %s205, 1
          %s648 = smul.addr %s647, 16
          %s649 = scalar_lea.vmem [#allocation11], %s648
          %651 = dma.done %s646, 256
        $region80: #{tpu_custom_call.1} parent=71 // pred_fallthru
          _
      $region72: #{tpu_custom_call.1} parent=5 // pred_fallthru
        _
    $region6: #{tpu_custom_call.1} parent=1 // loop_footer
      %s28 = sadd.s32 1, %s24
    $region7: #{tpu_custom_call.1} parent=1 // loop_footer_branch
      %23 = sbr.rel target = $region3
    $region8: #{tpu_custom_call.1} parent=1 // loop_exit
      _
    %652 = vsyncpa [#allocation4], 1
    %s653 = scalar_lea.sflag [#allocation4], 1
    %654 = vsyncpa %s653, 1
    %655 = vsyncpa [#allocation7], 1
    %656 = vsyncpa [#allocation5], 1
    %s657 = scalar_lea.sflag [#allocation5], 1
    %658 = vsyncpa %s657, 1
    %659 = vsyncpa [#allocation12], 1
    %s660 = scalar_lea.sflag [#allocation12], 1
    %661 = vsyncpa %s660, 1

</llo_original>
